<compile_context>
chip_gen: v6e
topology: v6e:2x2x1
jax: 0.10.0
libtpu: 0.0.40
codegen_flags: <defaults>
</compile_context>

<pallas_src>
import jax
import jax.numpy as jnp
from jax.experimental import pallas as pl
from jax.experimental.pallas import tpu as pltpu


def _noise_transform_kernel(x_ref, noise_ref, o_ref):
    # x_ref:     (TM, TL) lane-dense tile of the flattened image
    # noise_ref: (1,  TL) shared noise row (resident across the inner row-tile axis)
    # o_ref:     (TM, TL) output tile
    scale = noise_ref[...].astype(jnp.float32) + 1.0       # fold x + x*n -> x*(1+n)
    y = x_ref[...].astype(jnp.float32) * scale              # sublane broadcast of (1, TL)
    y = jnp.minimum(jnp.maximum(y, 0.0), 1.0)
    o_ref[...] = y.astype(o_ref.dtype)


def _choose_block(R, L, itemsize, target_bytes=2 * 1024 * 1024):
    """Pick (tm, tl): lane-dense tiles of roughly `target_bytes` (~2 MiB).

    tl is the full row (H*W) when an 8-row tile fits the budget, otherwise a large
    multiple of 128 (unmasked stores). tm is a multiple of 8 (or the full row count),
    so the (8, 128) BlockSpec constraint is always satisfied.
    ~2 MiB tiles => <= ~10 MiB of double-buffered VMEM: fits v5e/v6e/v7x defaults.
    """
    if L <= 128 or L * itemsize * 8 <= target_bytes:
        tl = L
    else:
        tl = min(L, max(128, (target_bytes // (8 * itemsize)) // 128 * 128))
    tm = max(1, target_bytes // (tl * itemsize))
    tm = max(8, (tm // 8) * 8)
    if tm >= R:
        tm = R  # full dim always satisfies the tiling rule
    return tm, tl


def noise_transform(x, noise):
    """x: (N, C, H, W), noise: (H, W) -> clamp(x * (1 + noise), 0, 1), same shape/dtype."""
    N, C, H, W = x.shape
    assert noise.shape == (H, W)

    R, L = N * C, H * W
    itemsize = jnp.dtype(x.dtype).itemsize

    # Free (row-major) reshapes: no transpose, no data movement.
    x2 = x.reshape(R, L)
    noise_row = noise.reshape(1, L)

    tm, tl = _choose_block(R, L, itemsize)
    # Lane-tile axis outer, row-tile axis inner -> shared noise block stays resident
    # across the inner loop (only re-fetched when the lane-tile changes).
    grid = (pl.cdiv(L, tl), pl.cdiv(R, tm))

    out2 = pl.pallas_call(
        _noise_transform_kernel,
        out_shape=jax.ShapeDtypeStruct((R, L), x.dtype),
        grid_spec=pltpu.PrefetchScalarGridSpec(
            num_scalar_prefetch=0,
            grid=grid,
            in_specs=[
                # lane-dense image tile: (row-block i, lane-block j)
                pl.BlockSpec((tm, tl), lambda j, i: (i, j)),
                # shared noise row: constant block index across the inner (i) axis
                pl.BlockSpec((1, tl), lambda j, i: (0, j)),
            ],
            out_specs=pl.BlockSpec((tm, tl), lambda j, i: (i, j)),
        ),
        compiler_params=pltpu.CompilerParams(
            # fully elementwise -> both grid axes parallel (megacore sharding)
            dimension_semantics=("parallel", "parallel"),
            vmem_limit_bytes=32 * 1024 * 1024,
        ),
        cost_estimate=pl.CostEstimate(
            flops=4 * R * L,  # mul, add, min, max per element
            bytes_accessed=(2 * R * L) * itemsize + L * jnp.dtype(noise.dtype).itemsize,
            transcendentals=0,
        ),
    )(x2, noise_row)

    return out2.reshape(N, C, H, W)


class NoiseTransform:
    """JAX/Pallas port of scnn.models.utils.NoiseTransform (forward pass)."""

    def __init__(self, mean, var):
        self.mean = float(mean)
        self.var = float(var)

    def __call__(self, x, key):
        H, W = x.shape[-2:]
        sigma = self.var ** 0.5
        # Noise generation is parameter-free RNG glue (H*W elements, negligible);
        # the elementwise hot path (broadcast mul + clamp) runs in the Pallas kernel.
        noise = self.mean + sigma * jax.random.normal(key, (H, W), dtype=jnp.float32)
        return noise_transform(x, noise)


if __name__ == "__main__":
    key = jax.random.PRNGKey(0)
    k_img, k_noise = jax.random.split(key)

    N, C, H, W = 2, 4, 16, 16
    x = jax.random.uniform(k_img, (N, C, H, W), dtype=jnp.float32)

    model = NoiseTransform(mean=0.0, var=10.0)
    out = model(x, k_noise)
    out = jax.block_until_ready(out)

    # correctness vs pure-JAX reference (same key -> same noise)
    sigma = 10.0 ** 0.5
    noise = 0.0 + sigma * jax.random.normal(k_noise, (H, W), dtype=jnp.float32)
    ref = jnp.minimum(jnp.maximum(x + x * noise, 0.0), 1.0)

    assert out.shape == (N, C, H, W)
    assert out.dtype == jnp.float32
    assert float(out.min()) >= 0.0 and float(out.max()) <= 1.0
    assert jnp.allclose(out, ref, atol=1e-6), float(jnp.abs(out - ref).max())

    print("KERNEL_OK")
</pallas_src>

<mosaic_0001>
module attributes {stable_mosaic.version = 11 : i64} {
  func.func @_noise_transform_kernel(%arg0: i32, %arg1: i32, %arg2: memref<8x256xf32, #tpu.memory_space<vmem>>, %arg3: memref<1x256xf32, #tpu.memory_space<vmem>>, %arg4: memref<8x256xf32, #tpu.memory_space<vmem>>) attributes {dimension_semantics = [#tpu.dimension_semantics<parallel>, #tpu.dimension_semantics<parallel>], iteration_bounds = array<i64: 1, 1>, scalar_prefetch = 0 : i64, scratch_operands = 0 : i64, tpu.core_type = #tpu.core_type<tc>, window_params = [{transform_indices = @transform_0, window_bounds = array<i64: 8, 256>}, {transform_indices = @transform_1, window_bounds = array<i64: 1, 256>}, {transform_indices = @transform_2, window_bounds = array<i64: 8, 256>}]} {
    %c0 = arith.constant 0 : index
    %c0_0 = arith.constant 0 : index
    %0 = vector.load %arg3[%c0, %c0_0] : memref<1x256xf32, #tpu.memory_space<vmem>>, vector<1x256xf32>
    %cst = arith.constant 1.000000e+00 : f32
    %1 = vector.broadcast %cst : f32 to vector<1x256xf32>
    %2 = arith.addf %0, %1 : vector<1x256xf32>
    %c0_1 = arith.constant 0 : index
    %c0_2 = arith.constant 0 : index
    %3 = vector.load %arg2[%c0_1, %c0_2] : memref<8x256xf32, #tpu.memory_space<vmem>>, vector<8x256xf32>
    %4 = vector.broadcast %2 : vector<1x256xf32> to vector<8x256xf32>
    %5 = arith.mulf %3, %4 : vector<8x256xf32>
    %cst_3 = arith.constant 0.000000e+00 : f32
    %6 = vector.broadcast %cst_3 : f32 to vector<8x256xf32>
    %7 = arith.maximumf %5, %6 : vector<8x256xf32>
    %cst_4 = arith.constant 1.000000e+00 : f32
    %8 = vector.broadcast %cst_4 : f32 to vector<8x256xf32>
    %9 = arith.minimumf %7, %8 : vector<8x256xf32>
    %c0_5 = arith.constant 0 : index
    %c0_6 = arith.constant 0 : index
    %10 = vector.load %arg4[%c0_5, %c0_6] : memref<8x256xf32, #tpu.memory_space<vmem>>, vector<8x256xf32>
    tpu.vector_store %arg4[%c0_5, %c0_6], %9 {strides = array<i32>} : memref<8x256xf32, #tpu.memory_space<vmem>>, vector<8x256xf32>,
    return
  }
  func.func @transform_0(%arg0: i32, %arg1: i32) -> (i32, i32) {
    %c0_i32 = arith.constant 0 : i32
    return %arg1, %arg0 : i32, i32
  }
  func.func @transform_1(%arg0: i32, %arg1: i32) -> (i32, i32) {
    %c0_i32 = arith.constant 0 : i32
    %c0_i32_0 = arith.constant 0 : i32
    return %c0_i32, %arg0 : i32, i32
  }
  func.func @transform_2(%arg0: i32, %arg1: i32) -> (i32, i32) {
    %c0_i32 = arith.constant 0 : i32
    return %arg1, %arg0 : i32, i32
  }
}

</mosaic_0001>

<llo_original>
// kernel: tpu_custom_call.1
$region0: #{tpu_custom_call.1}
  #allocation0 [shape = 'u32[]', space=smem, size = 0x4, offset = 0x4, fixed_abs, tag = 'smem constant byte address 0x4 - core index']
  #allocation1 [shape = 'u32[144,128]{1,0:T(1,128)}', space=vmem, size = 0x12000, scoped, tag = 'internal scratch']
  %s0 = inlined_call_operand.hbm [shape: f32[8,256], index: 0, kind: input, shape index: {}]
  %s1 = inlined_call_operand.hbm [shape: f32[1,256], index: 1, kind: input, shape index: {}]
  %s2 = inlined_call_operand.hbm [shape: f32[8,256], index: 2, kind: output, shape index: {}]
  %s3 = sld [smem:[#allocation0]]
  $region26: #{tpu_custom_call.1} parent=0
    _
  %s5 = ssub.s32 1, %s3
  %s6 = scalar_select 0, %s5, %s3
  $region1: #{tpu_custom_call.1} parent=0
    #allocation2 [shape = 'u8[8192]{0}', space=vmem, size = 0x2000, scoped, tag = 'input window, operand 0, single buffered']
    #allocation3 [shape = 's32[1]{0}', space=sflag, size = 0x4, scoped, tag = 'scoped memory for tpu_custom_call.1']
    #allocation4 [shape = 's32[1]{0}', space=sflag, size = 0x4, scoped, tag = 'scoped memory for tpu_custom_call.1']
    #allocation5 [shape = 'u8[1024]{0}', space=vmem, size = 0x400, scoped, tag = 'input window, operand 1, single buffered']
    #allocation6 [shape = 's32[1]{0}', space=sflag, size = 0x4, scoped, tag = 'scoped memory for tpu_custom_call.1']
    #allocation7 [shape = 'u8[8192]{0}', space=vmem, size = 0x2000, scoped, tag = 'output window, operand 0, single buffered']
    %7 = vsyncpa [#allocation3], 0
    %8 = vsyncpa [#allocation6], 0
    %9 = vsyncpa [#allocation4], 0
    // Predicated region
    $region2: #{tpu_custom_call.1} parent=1 // pred_check
      _
    $region3: #{tpu_custom_call.1} parent=1 // pred_check_branch
      %11 = sbr.rel (0) target = $region5
    $region4: #{tpu_custom_call.1} parent=1 // pred_region
      %s13 = ssub.s32 256, 256
      %14 = vsyncadd [#allocation3], %s13
      %s16 = sshll.u32 [#allocation2], 4
      %s17 = int_to_ptr.vmem [resolvable:$true] %s16
      %19 = dma.hbm_to_vmem [thread:$0]  %s0, 256, %s17, [#allocation3]
    $region5: #{tpu_custom_call.1} parent=1 // pred_fallthru
      _
    // Predicated region
    $region6: #{tpu_custom_call.1} parent=1 // pred_check
      _
    $region7: #{tpu_custom_call.1} parent=1 // pred_check_branch
      %21 = sbr.rel (0) target = $region9
    $region8: #{tpu_custom_call.1} parent=1 // pred_region
      %s23 = ssub.s32 32, 32
      %24 = vsyncadd [#allocation6], %s23
      %s26 = sshll.u32 [#allocation5], 4
      %s27 = int_to_ptr.vmem [resolvable:$true] %s26
      %29 = dma.hbm_to_vmem [thread:$0]  %s1, 32, %s27, [#allocation6]
    $region9: #{tpu_custom_call.1} parent=1 // pred_fallthru
      _
    // Predicated region
    $region10: #{tpu_custom_call.1} parent=1 // pred_check
      _
    $region11: #{tpu_custom_call.1} parent=1 // pred_check_branch
      %31 = sbr.rel (0) target = $region13
    $region12: #{tpu_custom_call.1} parent=1 // pred_region
      %32 = dma.done [#allocation3], 256
    $region13: #{tpu_custom_call.1} parent=1 // pred_fallthru
      _
    // Predicated region
    $region14: #{tpu_custom_call.1} parent=1 // pred_check
      _
    $region15: #{tpu_custom_call.1} parent=1 // pred_check_branch
      %34 = sbr.rel (0) target = $region17
    $region16: #{tpu_custom_call.1} parent=1 // pred_region
      %35 = dma.done [#allocation6], 32
    $region17: #{tpu_custom_call.1} parent=1 // pred_fallthru
      _
    %v36 = vld [vmem:[#allocation5] sm:$0x3]
    %v37 = vadd.f32 %v36, 1.0
    %v38 = vld [vmem:[#allocation2] sm:$0xff]
    %v39 = vld [vmem:[#allocation2 + $0x8] sm:$0xff]
    %v41 = vlaneseq
    %v42 = vshrl.u32 %v41, 7
    %v43 = vsub.s32 0, %v42
    %v44 = vrot.slane %v37, %v43
    %v45 = vlaneseq
    %v46 = vshrl.u32 %v45, 7
    %v47 = vsub.s32 1, %v46
    %v48 = vrot.slane %v37, %v47
    %v51 = vmul.f32 %v38, %v44
    %v52 = vmul.f32 %v39, %v48
    %v53 = vmax.f32 %v51, 0.0
    %v54 = vmax.f32 %v52, 0.0
    %v55 = vmin.f32 %v53, 1.0
    %v56 = vmin.f32 %v54, 1.0
    %57 = vst [vmem:[#allocation7] sm:$0xff] %v55
    %58 = vst [vmem:[#allocation7 + $0x8] sm:$0xff] %v56
    // Predicated region
    $region18: #{tpu_custom_call.1} parent=1 // pred_check
      _
    $region19: #{tpu_custom_call.1} parent=1 // pred_check_branch
      %60 = sbr.rel (0) target = $region21
    $region20: #{tpu_custom_call.1} parent=1 // pred_region
      %s62 = ssub.s32 256, 256
      %63 = vsyncadd [#allocation4], %s62
      %s65 = sshll.u32 [#allocation7], 4
      %s66 = int_to_ptr.vmem [resolvable:$true] %s65
      %68 = dma.vmem_to_hbm [thread:$0]  %s66, 256, %s2, [#allocation4]
    $region21: #{tpu_custom_call.1} parent=1 // pred_fallthru
      _
    // Predicated region
    $region22: #{tpu_custom_call.1} parent=1 // pred_check
      _
    $region23: #{tpu_custom_call.1} parent=1 // pred_check_branch
      %70 = sbr.rel (0) target = $region25
    $region24: #{tpu_custom_call.1} parent=1 // pred_region
      %71 = dma.done [#allocation4], 256
    $region25: #{tpu_custom_call.1} parent=1 // pred_fallthru
      _
    %72 = vsyncpa [#allocation3], 1
    %73 = vsyncpa [#allocation6], 1
    %74 = vsyncpa [#allocation4], 1

</llo_original>
